<compile_context>
chip_gen: v7x
topology: tpu7x:2x2x1
jax: 0.10.0
libtpu: 0.0.40
codegen_flags: <defaults>
</compile_context>

<pallas_src>
import jax
import jax.numpy as jnp
from jax.experimental import pallas as pl
from jax.experimental.pallas import tpu as pltpu


def _fused_model_kernel(xp_ref, w1_ref, b1_ref, w2_ref, b2_ref, mask_ref, o_ref):
    # xp_ref:  (Cin, Mp)   zero-padded(2) input, spatially flattened
    # w1_ref:  (Cmid, Cin) conv1 weight (PyTorch out,in layout)
    # b1_ref:  (1, Cmid)   conv1 bias
    # w2_ref:  (Cout, Cmid) conv2 weight
    # b2_ref:  (Cout, 1)   conv2 bias
    # mask_ref:(1, Mp)     1.0 on the outermost output ring, 0.0 elsewhere
    # o_ref:   (Cout, Mp)
    w2 = w2_ref[...]                                        # (Cout, Cmid)
    b2c = b2_ref[...]                                       # (Cout, 1)

    # Fold the two 1x1 convs (conv2 sees the raw v1, relu(v1) is dead code).
    wct = jnp.dot(w2, w1_ref[...],
                  preferred_element_type=jnp.float32)       # (Cout, Cin)
    bc = jnp.sum(w2 * b1_ref[...], axis=1, keepdims=True) + b2c   # (Cout, 1)

    # One MXU matmul over the padded spatial grid.
    acc = jnp.dot(wct, xp_ref[...],
                  preferred_element_type=jnp.float32)       # (Cout, Mp)

    # Per-column bias: b2 on the outermost ring, bc elsewhere.  The padded input is
    # zero on both constant rings, so acc contributes nothing there.
    vals = acc + bc + mask_ref[...] * (b2c - bc)
    o_ref[...] = jnp.maximum(vals, 0.0).astype(o_ref.dtype)


def _padded_vmem_bytes(shape, itembytes=4):
    r = ((shape[0] + 7) // 8) * 8
    c = ((shape[1] + 127) // 128) * 128
    return r * c * itembytes


def _fused_model_pallas(xp_flat, w1m, b1r, w2m, b2c, mask):
    Cin, Mp = xp_flat.shape
    Cout = w2m.shape[0]

    flops = 2 * Cout * Cin * Mp + 2 * Cout * w2m.shape[1] * (Cin + 1)
    bytes_accessed = 4 * (xp_flat.size + Cout * Mp + w1m.size + w2m.size
                          + b1r.size + b2c.size + mask.size)
    footprint = sum(_padded_vmem_bytes(a.shape) for a in
                    (xp_flat, w1m, b1r, w2m, b2c, mask)) + _padded_vmem_bytes((Cout, Mp))
    vmem_limit = 3 * footprint + (2 << 20)   # generous headroom; tiny vs 32 MiB default

    vmem = pl.BlockSpec(memory_space=pltpu.MemorySpace.VMEM)
    return pl.pallas_call(
        _fused_model_kernel,
        out_shape=jax.ShapeDtypeStruct((Cout, Mp), jnp.float32),
        in_specs=[vmem] * 6,
        out_specs=vmem,
        cost_estimate=pl.CostEstimate(flops=flops, transcendentals=0,
                                      bytes_accessed=bytes_accessed),
        compiler_params=pltpu.CompilerParams(vmem_limit_bytes=int(vmem_limit)),
    )(xp_flat, w1m, b1r, w2m, b2c, mask)


def model_forward(x, w1, b1, w2, b2):
    """Reproduces Model.forward.

    x:  (1, Cin, H, W)        (NCHW, like the PyTorch module)
    w1: (Cmid, Cin, 1, 1), b1: (Cmid,)   -- conv1 params (PyTorch layout)
    w2: (Cout, Cmid, 1, 1), b2: (Cout,)  -- conv2 params
    returns (1, Cout, H + 4, W + 4)
    """
    N, Cin, H, W = x.shape
    assert N == 1
    Cmid = w1.shape[0]
    Cout = w2.shape[0]
    Hp, Wp = H + 4, W + 4
    Mp = Hp * Wp

    # Single spatial zero-pad by 2 — the only non-bitcast XLA op outside the kernel.
    xp_flat = jnp.pad(x[0], ((0, 0), (2, 2), (2, 2))).reshape(Cin, Mp)

    # Parameter reshapes are free (contiguous bitcasts).
    w1m = w1.reshape(Cmid, Cin)
    w2m = w2.reshape(Cout, Cmid)
    b1r = b1.reshape(1, Cmid)
    b2c = b2.reshape(Cout, 1)

    # Outermost-ring selector; depends only on static shapes -> constant-folded by XLA.
    row = jax.lax.broadcasted_iota(jnp.int32, (Hp, Wp), 0)
    col = jax.lax.broadcasted_iota(jnp.int32, (Hp, Wp), 1)
    outer = (row == 0) | (row == Hp - 1) | (col == 0) | (col == Wp - 1)
    mask = outer.astype(jnp.float32).reshape(1, Mp)

    out_flat = _fused_model_pallas(xp_flat, w1m, b1r, w2m, b2c, mask)  # (Cout, Mp)
    return out_flat.reshape(1, Cout, Hp, Wp)                           # free bitcast


def _reference_forward(x, w1, b1, w2, b2):
    """Pure-jnp reference of the un-folded module semantics."""
    hp = jax.lax.Precision.HIGHEST
    xpad = jnp.pad(x, ((0, 0), (0, 0), (1, 1), (1, 1)))
    v1 = jnp.einsum("nchw,oc->nohw", xpad, w1[:, :, 0, 0], precision=hp) \
        + b1[None, :, None, None]
    # v2 = relu(v1) is dead code in the original module.
    v1p = jnp.pad(v1, ((0, 0), (0, 0), (1, 1), (1, 1)))
    v3 = jnp.einsum("nchw,oc->nohw", v1p, w2[:, :, 0, 0], precision=hp) \
        + b2[None, :, None, None]
    return jnp.maximum(v3, 0.0)


if __name__ == "__main__":
    key = jax.random.PRNGKey(0)
    k_x, k_w1, k_b1, k_w2, k_b2 = jax.random.split(key, 5)

    # Small shapes consistent with the module: N=1, Cin=33, spatial 16x16.
    C_IN, C_MID, C_OUT = 33, 16, 32
    H = W = 16
    x = jax.random.normal(k_x, (1, C_IN, H, W), dtype=jnp.float32)

    # Conv2d(kernel_size=1) parameters in PyTorch layout.
    w1 = jax.random.normal(k_w1, (C_MID, C_IN, 1, 1), dtype=jnp.float32) * 0.1
    b1 = jax.random.normal(k_b1, (C_MID,), dtype=jnp.float32) * 0.1
    w2 = jax.random.normal(k_w2, (C_OUT, C_MID, 1, 1), dtype=jnp.float32) * 0.1
    b2 = jax.random.normal(k_b2, (C_OUT,), dtype=jnp.float32) * 0.1

    fwd = jax.jit(model_forward)
    out = jax.block_until_ready(fwd(x, w1, b1, w2, b2))

    ref = _reference_forward(x, w1, b1, w2, b2)
    assert out.shape == (1, C_OUT, H + 4, W + 4), out.shape
    assert jnp.allclose(out, ref, atol=1e-4, rtol=1e-4), \
        float(jnp.max(jnp.abs(out - ref)))

    print("KERNEL_OK")
</pallas_src>

<mosaic_0001>
module attributes {stable_mosaic.version = 11 : i64} {
  func.func @_fused_model_kernel(%arg0: memref<33x400xf32, #tpu.memory_space<vmem>>, %arg1: memref<16x33xf32, #tpu.memory_space<vmem>>, %arg2: memref<1x16xf32, #tpu.memory_space<vmem>>, %arg3: memref<32x16xf32, #tpu.memory_space<vmem>>, %arg4: memref<32x1xf32, #tpu.memory_space<vmem>>, %arg5: memref<1x400xf32, #tpu.memory_space<vmem>>, %arg6: memref<32x400xf32, #tpu.memory_space<vmem>>) attributes {dimension_semantics = [], scalar_prefetch = 0 : i64, scratch_operands = 0 : i64, tpu.core_type = #tpu.core_type<tc>} {
    %c0 = arith.constant 0 : index
    %c0_0 = arith.constant 0 : index
    %0 = vector.load %arg3[%c0, %c0_0] : memref<32x16xf32, #tpu.memory_space<vmem>>, vector<32x16xf32>
    %c0_1 = arith.constant 0 : index
    %c0_2 = arith.constant 0 : index
    %1 = vector.load %arg4[%c0_1, %c0_2] : memref<32x1xf32, #tpu.memory_space<vmem>>, vector<32x1xf32>
    %c0_3 = arith.constant 0 : index
    %c0_4 = arith.constant 0 : index
    %2 = vector.load %arg1[%c0_3, %c0_4] : memref<16x33xf32, #tpu.memory_space<vmem>>, vector<16x33xf32>
    %cst = arith.constant dense<0.000000e+00> : vector<32x33xf32>
    %3 = tpu.matmul %0, %2, %cst {dimension_numbers = #tpu.dot_dimension_numbers<[1], [0], [0], [1], [0, 0, 1, 1], [], []>} : vector<32x16xf32>, vector<16x33xf32>, vector<32x33xf32> -> vector<32x33xf32>
    %c0_5 = arith.constant 0 : index
    %c0_6 = arith.constant 0 : index
    %4 = vector.load %arg2[%c0_5, %c0_6] : memref<1x16xf32, #tpu.memory_space<vmem>>, vector<1x16xf32>
    %5 = vector.broadcast %4 : vector<1x16xf32> to vector<32x16xf32>
    %6 = arith.mulf %0, %5 : vector<32x16xf32>
    %cst_7 = arith.constant dense<0.000000e+00> : vector<32xf32>
    %7 = vector.multi_reduction <add>, %6, %cst_7 [1] : vector<32x16xf32> to vector<32xf32>
    %8 = vector.shape_cast %7 : vector<32xf32> to vector<32x1xf32>
    %9 = arith.addf %8, %1 : vector<32x1xf32>
    %c0_8 = arith.constant 0 : index
    %c0_9 = arith.constant 0 : index
    %10 = vector.load %arg0[%c0_8, %c0_9] : memref<33x400xf32, #tpu.memory_space<vmem>>, vector<33x400xf32>
    %cst_10 = arith.constant dense<0.000000e+00> : vector<32x400xf32>
    %11 = tpu.matmul %3, %10, %cst_10 {dimension_numbers = #tpu.dot_dimension_numbers<[1], [0], [0], [1], [0, 0, 1, 1], [], []>} : vector<32x33xf32>, vector<33x400xf32>, vector<32x400xf32> -> vector<32x400xf32>
    %12 = vector.broadcast %9 : vector<32x1xf32> to vector<32x400xf32>
    %13 = arith.addf %11, %12 : vector<32x400xf32>
    %c0_11 = arith.constant 0 : index
    %c0_12 = arith.constant 0 : index
    %14 = vector.load %arg5[%c0_11, %c0_12] : memref<1x400xf32, #tpu.memory_space<vmem>>, vector<1x400xf32>
    %15 = arith.subf %1, %9 : vector<32x1xf32>
    %16 = vector.broadcast %14 : vector<1x400xf32> to vector<32x400xf32>
    %17 = vector.broadcast %15 : vector<32x1xf32> to vector<32x400xf32>
    %18 = arith.mulf %16, %17 : vector<32x400xf32>
    %19 = arith.addf %13, %18 : vector<32x400xf32>
    %cst_13 = arith.constant 0.000000e+00 : f32
    %20 = vector.broadcast %cst_13 : f32 to vector<32x400xf32>
    %21 = arith.maximumf %19, %20 : vector<32x400xf32>
    %c0_14 = arith.constant 0 : index
    %c0_15 = arith.constant 0 : index
    %22 = vector.load %arg6[%c0_14, %c0_15] : memref<32x400xf32, #tpu.memory_space<vmem>>, vector<32x400xf32>
    tpu.vector_store %arg6[%c0_14, %c0_15], %21 {strides = array<i32>} : memref<32x400xf32, #tpu.memory_space<vmem>>, vector<32x400xf32>,
    return
  }
}

</mosaic_0001>

<llo_original>
// kernel: model_forward.1
$region0: #{model_forward.1}
  #allocation0 [shape = 'u32[]', space=smem, size = 0x4, offset = 0x4, fixed_abs, tag = 'smem constant byte address 0x4 - core index']
  #allocation1 [shape = 'u32[144,128]{1,0:T(1,128)}', space=vmem, size = 0x12000, scoped, tag = 'internal scratch']
  %s0 = inlined_call_operand.vmem [shape: f32[33,400], index: 0, kind: input, shape index: {}]
  %s1 = inlined_call_operand.vmem [shape: f32[16,33], index: 1, kind: input, shape index: {}]
  %s2 = inlined_call_operand.vmem [shape: f32[1,16], index: 2, kind: input, shape index: {}]
  %s3 = inlined_call_operand.vmem [shape: f32[32,16], index: 3, kind: input, shape index: {}]
  %s4 = inlined_call_operand.vmem [shape: f32[32,1], index: 4, kind: input, shape index: {}]
  %s5 = inlined_call_operand.vmem [shape: f32[1,400], index: 5, kind: input, shape index: {}]
  %s6 = inlined_call_operand.vmem [shape: f32[32,400], index: 6, kind: output, shape index: {}]
  %s7 = sld [smem:[#allocation0]]
  $region34: #{model_forward.1} parent=0
    _
  %s9 = ssub.s32 1, %s7
  %s10 = scalar_select 0, %s9, %s7
  // Predicated region
  $region2: #{model_forward.1} parent=0 // pred_check
    _
  $region3: #{model_forward.1} parent=0 // pred_check_branch
    %12 = sbr.rel (0) target = $region5
  $region4: #{model_forward.1} parent=0 // pred_region
    _
  $region5: #{model_forward.1} parent=0 // pred_fallthru
    _
  // Predicated region
  $region6: #{model_forward.1} parent=0 // pred_check
    _
  $region7: #{model_forward.1} parent=0 // pred_check_branch
    %14 = sbr.rel (0) target = $region9
  $region8: #{model_forward.1} parent=0 // pred_region
    _
  $region9: #{model_forward.1} parent=0 // pred_fallthru
    _
  // Predicated region
  $region10: #{model_forward.1} parent=0 // pred_check
    _
  $region11: #{model_forward.1} parent=0 // pred_check_branch
    %16 = sbr.rel (0) target = $region13
  $region12: #{model_forward.1} parent=0 // pred_region
    _
  $region13: #{model_forward.1} parent=0 // pred_fallthru
    _
  // Predicated region
  $region14: #{model_forward.1} parent=0 // pred_check
    _
  $region15: #{model_forward.1} parent=0 // pred_check_branch
    %18 = sbr.rel (0) target = $region17
  $region16: #{model_forward.1} parent=0 // pred_region
    _
  $region17: #{model_forward.1} parent=0 // pred_fallthru
    _
  // Predicated region
  $region18: #{model_forward.1} parent=0 // pred_check
    _
  $region19: #{model_forward.1} parent=0 // pred_check_branch
    %20 = sbr.rel (0) target = $region21
  $region20: #{model_forward.1} parent=0 // pred_region
    _
  $region21: #{model_forward.1} parent=0 // pred_fallthru
    _
  // Predicated region
  $region22: #{model_forward.1} parent=0 // pred_check
    _
  $region23: #{model_forward.1} parent=0 // pred_check_branch
    %22 = sbr.rel (0) target = $region25
  $region24: #{model_forward.1} parent=0 // pred_region
    _
  $region25: #{model_forward.1} parent=0 // pred_fallthru
    _
  %v23 = vld [vmem:[%s3] sm:$0xff]
  %v24 = vld [vmem:[%s3 + $0x8] sm:$0xff]
  %v25 = vld [vmem:[%s3 + $0x10] sm:$0xff]
  %v26 = vld [vmem:[%s3 + $0x18] sm:$0xff]
  %v27 = vld [vmem:[%s4] sm:$0xff]
  %v28 = vld [vmem:[%s4 + $0x8] sm:$0xff]
  %v29 = vld [vmem:[%s4 + $0x10] sm:$0xff]
  %v30 = vld [vmem:[%s4 + $0x18] sm:$0xff]
  %v31 = vld [vmem:[%s1] sm:$0xff]
  %v32 = vld [vmem:[%s1 + $0x8] sm:$0xff]
  %vm33 = vcmask 130048
  %v35 = vsel %vm33, %v23, 0
  %v38 = vsel %vm33, %v24, 0
  %v41 = vsel %vm33, %v25, 0
  %v44 = vsel %vm33, %v26, 0
  %46 = vmatprep.subr.mxu0 0.0
  %47 = vmatpush1.msra.mxu0 %v31
  %48 = vmatprep.subr.mxu0 0.0
  %49 = vmatpush1.msra.mxu0 %v32
  %50 = vmatprep.subr.mxu0 0.0
  %51 = vmatpush1.msra.mxu0 0.0
  %52 = vmatprep.subr.mxu0 0.0
  %53 = vmatpush1.msra.mxu0 0.0
  %54 = vmatprep.subr.mxu0 0.0
  %55 = vmatpush1.msra.mxu0 0.0
  %56 = vmatprep.subr.mxu0 0.0
  %57 = vmatpush1.msra.mxu0 0.0
  %58 = vmatprep.subr.mxu0 0.0
  %59 = vmatpush1.msra.mxu0 0.0
  %60 = vmatprep.subr.mxu0 0.0
  %61 = vmatpush1.msra.mxu0 0.0
  %62 = vmatprep.subr.mxu0 0.0
  %63 = vmatpush1.msra.mxu0 0.0
  %64 = vmatprep.subr.mxu0 0.0
  %65 = vmatpush1.msra.mxu0 0.0
  %66 = vmatprep.subr.mxu0 0.0
  %67 = vmatpush1.msra.mxu0 0.0
  %68 = vmatprep.subr.mxu0 0.0
  %69 = vmatpush1.msra.mxu0 0.0
  %70 = vmatprep.subr.mxu0 0.0
  %71 = vmatpush1.msra.mxu0 0.0
  %72 = vmatprep.subr.mxu0 0.0
  %73 = vmatpush1.msra.mxu0 0.0
  %74 = vmatprep.subr.mxu0 0.0
  %75 = vmatpush1.msra.mxu0 0.0
  %76 = vmatprep.subr.mxu0 0.0
  %77 = vmatpush1.msra.mxu0 0.0
  %78 = vmatprep.subr.mxu0 0.0
  %79 = vmatpush1.msra.mxu0 0.0
  %80 = vmatprep.subr.mxu0 0.0
  %81 = vmatpush1.msra.mxu0 0.0
  %82 = vmatprep.subr.mxu0 0.0
  %83 = vmatpush1.msra.mxu0 0.0
  %84 = vmatprep.subr.mxu0 0.0
  %85 = vmatpush1.msra.mxu0 0.0
  %86 = vmatprep.subr.mxu0 0.0
  %87 = vmatpush1.msra.mxu0 0.0
  %88 = vmatprep.subr.mxu0 0.0
  %89 = vmatpush1.msra.mxu0 0.0
  %90 = vmatprep.subr.mxu0 0.0
  %91 = vmatpush1.msra.mxu0 0.0
  %92 = vmatprep.subr.mxu0 0.0
  %93 = vmatpush1.msra.mxu0 0.0
  %94 = vmatprep.subr.mxu0 0.0
  %95 = vmatpush1.msra.mxu0 0.0
  %96 = vmatprep.subr.mxu0 0.0
  %97 = vmatpush1.msra.mxu0 0.0
  %98 = vmatprep.subr.mxu0 0.0
  %99 = vmatpush1.msra.mxu0 0.0
  %100 = vmatprep.subr.mxu0 0.0
  %101 = vmatpush1.msra.mxu0 0.0
  %102 = vmatprep.subr.mxu0 0.0
  %103 = vmatpush1.msra.mxu0 0.0
  %104 = vmatprep.subr.mxu0 0.0
  %105 = vmatpush1.msra.mxu0 0.0
  %106 = vmatprep.subr.mxu0 0.0
  %107 = vmatpush1.msra.mxu0 0.0
  %108 = vmatprep.subr.mxu0 0.0
  %109 = vmatpush1.msra.mxu0 0.0
  %110 = vmatprep.mubr.f32.mxu0 0.0
  %111 = vmatmul.mubr.f32.gmra.mrb[0].mxu0 %v35
  %v112 = vpop.f32.mrb[0].mxu0
  %v113 = vadd.f32 0.0, %v112
  %v114 = vpop.f32.mrb[0].mxu0
  %115 = vmatprep.mubr.f32.mxu0 0.0
  %116 = vmatmul.mubr.f32.gmra.mrb[0].mxu0 %v38
  %v117 = vpop.f32.mrb[0].mxu0
  %v118 = vadd.f32 0.0, %v117
  %v119 = vpop.f32.mrb[0].mxu0
  %120 = vmatprep.mubr.f32.mxu0 0.0
  %121 = vmatmul.mubr.f32.gmra.mrb[0].mxu0 %v41
  %v122 = vpop.f32.mrb[0].mxu0
  %v123 = vadd.f32 0.0, %v122
  %v124 = vpop.f32.mrb[0].mxu0
  %125 = vmatprep.mubr.f32.mxu0 0.0
  %126 = vmatmul.mubr.f32.gmra.mrb[0].mxu0 %v44
  %v127 = vpop.f32.mrb[0].mxu0
  %v128 = vadd.f32 0.0, %v127
  %v129 = vpop.f32.mrb[0].mxu0
  %130 = vdwg.mxu0
  %v131 = vld [vmem:[%s2] sm:$0x1]
  %v133 = vlaneseq
  %v134 = vshrl.u32 %v133, 7
  %v135 = vsub.s32 0, %v134
  %v136 = vrot.slane %v131, %v135
  %v138 = vmul.f32 %v23, %v136
  %v139 = vmul.f32 %v24, %v136
  %v140 = vmul.f32 %v25, %v136
  %v141 = vmul.f32 %v26, %v136
  %v142 = vsel %vm33, %v138, 0.0
  %143 = vadd.xlane.f32.xlu0 %v142
  %v144 = vpop.xlane.xlu0 %143
  %v145 = vsel %vm33, %v139, 0.0
  %146 = vadd.xlane.f32.xlu0 %v145
  %v147 = vpop.xlane.xlu0 %146
  %v148 = vsel %vm33, %v140, 0.0
  %149 = vadd.xlane.f32.xlu0 %v148
  %v150 = vpop.xlane.xlu0 %149
  %v151 = vsel %vm33, %v141, 0.0
  %152 = vadd.xlane.f32.xlu0 %v151
  %v153 = vpop.xlane.xlu0 %152
  %v154 = vadd.f32 %v144, %v27
  %v155 = vadd.f32 %v147, %v28
  %v156 = vadd.f32 %v150, %v29
  %v157 = vadd.f32 %v153, %v30
  %v158 = vld [vmem:[%s0] sm:$0xff]
  %v159 = vld [vmem:[%s0 + $0x8] sm:$0xff]
  %v160 = vld [vmem:[%s0 + $0x10] sm:$0xff]
  %v161 = vld [vmem:[%s0 + $0x18] sm:$0xff]
  %v162 = vld [vmem:[%s0 + $0x20] sm:$0xff]
  %v163 = vld [vmem:[%s0 + $0x28] sm:$0xff]
  %v164 = vld [vmem:[%s0 + $0x30] sm:$0xff]
  %v165 = vld [vmem:[%s0 + $0x38] sm:$0xff]
  %v166 = vld [vmem:[%s0 + $0x40] sm:$0xff]
  %v167 = vld [vmem:[%s0 + $0x48] sm:$0xff]
  %v168 = vld [vmem:[%s0 + $0x50] sm:$0xff]
  %v169 = vld [vmem:[%s0 + $0x58] sm:$0xff]
  %v170 = vld [vmem:[%s0 + $0x60] sm:$0xff]
  %v171 = vld [vmem:[%s0 + $0x68] sm:$0xff]
  %v172 = vld [vmem:[%s0 + $0x70] sm:$0xff]
  %v173 = vld [vmem:[%s0 + $0x78] sm:$0xff]
  %v174 = vld [vmem:[%s0 + $0x80] sm:$0x1]
  %v175 = vld [vmem:[%s0 + $0x88] sm:$0x1]
  %v176 = vld [vmem:[%s0 + $0x90] sm:$0x1]
  %v177 = vld [vmem:[%s0 + $0x98] sm:$0x1]
  %179 = vset.pattern.permute.xlu0 0
  %180 = vperm.xlu0 %179, %v154
  %v181 = vpop.permute.xlu0 %180
  %184 = vset.pattern.permute.xlu0 0
  %185 = vperm.xlu0 %184, %v155
  %v186 = vpop.permute.xlu0 %185
  %189 = vset.pattern.permute.xlu0 0
  %190 = vperm.xlu0 %189, %v156
  %v191 = vpop.permute.xlu0 %190
  %194 = vset.pattern.permute.xlu0 0
  %195 = vperm.xlu0 %194, %v157
  %v196 = vpop.permute.xlu0 %195
  %vm198 = vcmask 269312
  %v200 = vsel %vm198, %v113, 0
  %v203 = vsel %vm198, %v118, 0
  %v206 = vsel %vm198, %v123, 0
  %v209 = vsel %vm198, %v128, 0
  %vm211 = vcmask 1040384
  %v213 = vsel %vm211, %v174, 0
  %v216 = vsel %vm211, %v175, 0
  %v219 = vsel %vm211, %v176, 0
  %v222 = vsel %vm211, %v177, 0
  %224 = vmatprep.subr.mxu0 %v159
  %225 = vmatpush1.msra.mxu0 %v158
  %226 = vmatprep.subr.mxu0 %v163
  %227 = vmatpush1.msra.mxu0 %v162
  %228 = vmatprep.subr.mxu0 %v167
  %229 = vmatpush1.msra.mxu0 %v166
  %230 = vmatprep.subr.mxu0 %v171
  %231 = vmatpush1.msra.mxu0 %v170
  %232 = vmatprep.subr.mxu0 %v216
  %233 = vmatpush1.msra.mxu0 %v213
  %234 = vmatprep.subr.mxu0 0.0
  %235 = vmatpush1.msra.mxu0 0.0
  %236 = vmatprep.subr.mxu0 0.0
  %237 = vmatpush1.msra.mxu0 0.0
  %238 = vmatprep.subr.mxu0 0.0
  %239 = vmatpush1.msra.mxu0 0.0
  %240 = vmatprep.subr.mxu0 0.0
  %241 = vmatpush1.msra.mxu0 0.0
  %242 = vmatprep.subr.mxu0 0.0
  %243 = vmatpush1.msra.mxu0 0.0
  %244 = vmatprep.subr.mxu0 0.0
  %245 = vmatpush1.msra.mxu0 0.0
  %246 = vmatprep.subr.mxu0 0.0
  %247 = vmatpush1.msra.mxu0 0.0
  %248 = vmatprep.subr.mxu0 0.0
  %249 = vmatpush1.msra.mxu0 0.0
  %250 = vmatprep.subr.mxu0 0.0
  %251 = vmatpush1.msra.mxu0 0.0
  %252 = vmatprep.subr.mxu0 0.0
  %253 = vmatpush1.msra.mxu0 0.0
  %254 = vmatprep.subr.mxu0 0.0
  %255 = vmatpush1.msra.mxu0 0.0
  %256 = vmatprep.subr.mxu0 0.0
  %257 = vmatpush1.msra.mxu0 0.0
  %258 = vmatprep.subr.mxu0 0.0
  %259 = vmatpush1.msra.mxu0 0.0
  %260 = vmatprep.subr.mxu0 0.0
  %261 = vmatpush1.msra.mxu0 0.0
  %262 = vmatprep.subr.mxu0 0.0
  %263 = vmatpush1.msra.mxu0 0.0
  %264 = vmatprep.subr.mxu0 0.0
  %265 = vmatpush1.msra.mxu0 0.0
  %266 = vmatprep.subr.mxu0 0.0
  %267 = vmatpush1.msra.mxu0 0.0
  %268 = vmatprep.subr.mxu0 0.0
  %269 = vmatpush1.msra.mxu0 0.0
  %270 = vmatprep.subr.mxu0 0.0
  %271 = vmatpush1.msra.mxu0 0.0
  %272 = vmatprep.subr.mxu0 0.0
  %273 = vmatpush1.msra.mxu0 0.0
  %274 = vmatprep.subr.mxu0 0.0
  %275 = vmatpush1.msra.mxu0 0.0
  %276 = vmatprep.subr.mxu0 0.0
  %277 = vmatpush1.msra.mxu0 0.0
  %278 = vmatprep.subr.mxu0 0.0
  %279 = vmatpush1.msra.mxu0 0.0
  %280 = vmatprep.subr.mxu0 0.0
  %281 = vmatpush1.msra.mxu0 0.0
  %282 = vmatprep.subr.mxu0 0.0
  %283 = vmatpush1.msra.mxu0 0.0
  %284 = vmatprep.subr.mxu0 0.0
  %285 = vmatpush1.msra.mxu0 0.0
  %286 = vmatprep.subr.mxu0 0.0
  %287 = vmatpush1.msra.mxu0 0.0
  %288 = vmatprep.mubr.f32.mxu0 0.0
  %289 = vmatmul.mubr.f32.gmra.mrb[0].mxu0 %v200
  %v290 = vpop.f32.mrb[0].mxu0
  %v291 = vadd.f32 %v181, %v290
  %v292 = vpop.f32.mrb[0].mxu0
  %v293 = vadd.f32 %v181, %v292
  %294 = vmatprep.mubr.f32.mxu0 0.0
  %295 = vmatmul.mubr.f32.gmra.mrb[0].mxu0 %v203
  %v296 = vpop.f32.mrb[0].mxu0
  %v297 = vadd.f32 %v186, %v296
  %v298 = vpop.f32.mrb[0].mxu0
  %v299 = vadd.f32 %v186, %v298
  %300 = vmatprep.mubr.f32.mxu0 0.0
  %301 = vmatmul.mubr.f32.gmra.mrb[0].mxu0 %v206
  %v302 = vpop.f32.mrb[0].mxu0
  %v303 = vadd.f32 %v191, %v302
  %v304 = vpop.f32.mrb[0].mxu0
  %v305 = vadd.f32 %v191, %v304
  %306 = vmatprep.mubr.f32.mxu0 0.0
  %307 = vmatmul.mubr.f32.gmra.mrb[0].mxu0 %v209
  %v308 = vpop.f32.mrb[0].mxu0
  %v309 = vadd.f32 %v196, %v308
  %v310 = vpop.f32.mrb[0].mxu0
  %v311 = vadd.f32 %v196, %v310
  %312 = vdwg.mxu0
  %313 = vmatprep.subr.mxu0 %v161
  %314 = vmatpush1.msra.mxu0 %v160
  %315 = vmatprep.subr.mxu0 %v165
  %316 = vmatpush1.msra.mxu0 %v164
  %317 = vmatprep.subr.mxu0 %v169
  %318 = vmatpush1.msra.mxu0 %v168
  %319 = vmatprep.subr.mxu0 %v173
  %320 = vmatpush1.msra.mxu0 %v172
  %321 = vmatprep.subr.mxu0 %v222
  %322 = vmatpush1.msra.mxu0 %v219
  %323 = vmatprep.subr.mxu0 0.0
  %324 = vmatpush1.msra.mxu0 0.0
  %325 = vmatprep.subr.mxu0 0.0
  %326 = vmatpush1.msra.mxu0 0.0
  %327 = vmatprep.subr.mxu0 0.0
  %328 = vmatpush1.msra.mxu0 0.0
  %329 = vmatprep.subr.mxu0 0.0
  %330 = vmatpush1.msra.mxu0 0.0
  %331 = vmatprep.subr.mxu0 0.0
  %332 = vmatpush1.msra.mxu0 0.0
  %333 = vmatprep.subr.mxu0 0.0
  %334 = vmatpush1.msra.mxu0 0.0
  %335 = vmatprep.subr.mxu0 0.0
  %336 = vmatpush1.msra.mxu0 0.0
  %337 = vmatprep.subr.mxu0 0.0
  %338 = vmatpush1.msra.mxu0 0.0
  %339 = vmatprep.subr.mxu0 0.0
  %340 = vmatpush1.msra.mxu0 0.0
  %341 = vmatprep.subr.mxu0 0.0
  %342 = vmatpush1.msra.mxu0 0.0
  %343 = vmatprep.subr.mxu0 0.0
  %344 = vmatpush1.msra.mxu0 0.0
  %345 = vmatprep.subr.mxu0 0.0
  %346 = vmatpush1.msra.mxu0 0.0
  %347 = vmatprep.subr.mxu0 0.0
  %348 = vmatpush1.msra.mxu0 0.0
  %349 = vmatprep.subr.mxu0 0.0
  %350 = vmatpush1.msra.mxu0 0.0
  %351 = vmatprep.subr.mxu0 0.0
  %352 = vmatpush1.msra.mxu0 0.0
  %353 = vmatprep.subr.mxu0 0.0
  %354 = vmatpush1.msra.mxu0 0.0
  %355 = vmatprep.subr.mxu0 0.0
  %356 = vmatpush1.msra.mxu0 0.0
  %357 = vmatprep.subr.mxu0 0.0
  %358 = vmatpush1.msra.mxu0 0.0
  %359 = vmatprep.subr.mxu0 0.0
  %360 = vmatpush1.msra.mxu0 0.0
  %361 = vmatprep.subr.mxu0 0.0
  %362 = vmatpush1.msra.mxu0 0.0
  %363 = vmatprep.subr.mxu0 0.0
  %364 = vmatpush1.msra.mxu0 0.0
  %365 = vmatprep.subr.mxu0 0.0
  %366 = vmatpush1.msra.mxu0 0.0
  %367 = vmatprep.subr.mxu0 0.0
  %368 = vmatpush1.msra.mxu0 0.0
  %369 = vmatprep.subr.mxu0 0.0
  %370 = vmatpush1.msra.mxu0 0.0
  %371 = vmatprep.subr.mxu0 0.0
  %372 = vmatpush1.msra.mxu0 0.0
  %373 = vmatprep.subr.mxu0 0.0
  %374 = vmatpush1.msra.mxu0 0.0
  %375 = vmatprep.subr.mxu0 0.0
  %376 = vmatpush1.msra.mxu0 0.0
  %377 = vmatprep.mubr.f32.mxu0 0.0
  %378 = vmatmul.mubr.f32.gmra.mrb[0].mxu0 %v200
  %v379 = vpop.f32.mrb[0].mxu0
  %v380 = vadd.f32 %v181, %v379
  %v381 = vpop.f32.mrb[0].mxu0
  %v382 = vadd.f32 %v181, %v381
  %383 = vmatprep.mubr.f32.mxu0 0.0
  %384 = vmatmul.mubr.f32.gmra.mrb[0].mxu0 %v203
  %v385 = vpop.f32.mrb[0].mxu0
  %v386 = vadd.f32 %v186, %v385
  %v387 = vpop.f32.mrb[0].mxu0
  %v388 = vadd.f32 %v186, %v387
  %389 = vmatprep.mubr.f32.mxu0 0.0
  %390 = vmatmul.mubr.f32.gmra.mrb[0].mxu0 %v206
  %v391 = vpop.f32.mrb[0].mxu0
  %v392 = vadd.f32 %v191, %v391
  %v393 = vpop.f32.mrb[0].mxu0
  %v394 = vadd.f32 %v191, %v393
  %395 = vmatprep.mubr.f32.mxu0 0.0
  %396 = vmatmul.mubr.f32.gmra.mrb[0].mxu0 %v209
  %v397 = vpop.f32.mrb[0].mxu0
  %v398 = vadd.f32 %v196, %v397
  %v399 = vpop.f32.mrb[0].mxu0
  %v400 = vadd.f32 %v196, %v399
  %401 = vdwg.mxu0
  %v402 = vld [vmem:[%s5] sm:$0xf]
  %v403 = vsub.f32 %v27, %v154
  %v404 = vsub.f32 %v28, %v155
  %v405 = vsub.f32 %v29, %v156
  %v406 = vsub.f32 %v30, %v157
  %v408 = vlaneseq
  %v409 = vshrl.u32 %v408, 7
  %v410 = vsub.s32 0, %v409
  %v411 = vrot.slane %v402, %v410
  %v412 = vlaneseq
  %v413 = vshrl.u32 %v412, 7
  %v414 = vsub.s32 1, %v413
  %v415 = vrot.slane %v402, %v414
  %v416 = vlaneseq
  %v417 = vshrl.u32 %v416, 7
  %v418 = vsub.s32 2, %v417
  %v419 = vrot.slane %v402, %v418
  %v420 = vlaneseq
  %v421 = vshrl.u32 %v420, 7
  %v422 = vsub.s32 3, %v421
  %v423 = vrot.slane %v402, %v422
  %429 = vset.pattern.permute.xlu0 0
  %430 = vperm.xlu0 %429, %v403
  %v431 = vpop.permute.xlu0 %430
  %434 = vset.pattern.permute.xlu0 0
  %435 = vperm.xlu0 %434, %v404
  %v436 = vpop.permute.xlu0 %435
  %439 = vset.pattern.permute.xlu0 0
  %440 = vperm.xlu0 %439, %v405
  %v441 = vpop.permute.xlu0 %440
  %444 = vset.pattern.permute.xlu0 0
  %445 = vperm.xlu0 %444, %v406
  %v446 = vpop.permute.xlu0 %445
  %v448 = vmul.f32 %v411, %v431
  %v449 = vmul.f32 %v415, %v431
  %v450 = vmul.f32 %v419, %v431
  %v451 = vmul.f32 %v423, %v431
  %v452 = vmul.f32 %v411, %v436
  %v453 = vmul.f32 %v415, %v436
  %v454 = vmul.f32 %v419, %v436
  %v455 = vmul.f32 %v423, %v436
  %v456 = vmul.f32 %v411, %v441
  %v457 = vmul.f32 %v415, %v441
  %v458 = vmul.f32 %v419, %v441
  %v459 = vmul.f32 %v423, %v441
  %v460 = vmul.f32 %v411, %v446
  %v461 = vmul.f32 %v415, %v446
  %v462 = vmul.f32 %v419, %v446
  %v463 = vmul.f32 %v423, %v446
  %v464 = vadd.f32 %v291, %v448
  %v465 = vadd.f32 %v293, %v449
  %v466 = vadd.f32 %v380, %v450
  %v467 = vadd.f32 %v382, %v451
  %v468 = vadd.f32 %v297, %v452
  %v469 = vadd.f32 %v299, %v453
  %v470 = vadd.f32 %v386, %v454
  %v471 = vadd.f32 %v388, %v455
  %v472 = vadd.f32 %v303, %v456
  %v473 = vadd.f32 %v305, %v457
  %v474 = vadd.f32 %v392, %v458
  %v475 = vadd.f32 %v394, %v459
  %v476 = vadd.f32 %v309, %v460
  %v477 = vadd.f32 %v311, %v461
  %v478 = vadd.f32 %v398, %v462
  %v479 = vadd.f32 %v400, %v463
  %v480 = vmax.f32 %v464, 0.0
  %v481 = vmax.f32 %v465, 0.0
  %v482 = vmax.f32 %v466, 0.0
  %v483 = vmax.f32 %v467, 0.0
  %v484 = vmax.f32 %v468, 0.0
  %v485 = vmax.f32 %v469, 0.0
  %v486 = vmax.f32 %v470, 0.0
  %v487 = vmax.f32 %v471, 0.0
  %v488 = vmax.f32 %v472, 0.0
  %v489 = vmax.f32 %v473, 0.0
  %v490 = vmax.f32 %v474, 0.0
  %v491 = vmax.f32 %v475, 0.0
  %v492 = vmax.f32 %v476, 0.0
  %v493 = vmax.f32 %v477, 0.0
  %v494 = vmax.f32 %v478, 0.0
  %v495 = vmax.f32 %v479, 0.0
  %496 = vst [vmem:[%s6] sm:$0xff] %v480
  %497 = vst [vmem:[%s6 + $0x8] sm:$0xff] %v481
  %498 = vst [vmem:[%s6 + $0x10] sm:$0xff] %v482
  %499 = vst.msk [vmem:[%s6 + $0x18] sm:$0xff] %vm33, %v483
  %500 = vst [vmem:[%s6 + $0x20] sm:$0xff] %v484
  %501 = vst [vmem:[%s6 + $0x28] sm:$0xff] %v485
  %502 = vst [vmem:[%s6 + $0x30] sm:$0xff] %v486
  %503 = vst.msk [vmem:[%s6 + $0x38] sm:$0xff] %vm33, %v487
  %504 = vst [vmem:[%s6 + $0x40] sm:$0xff] %v488
  %505 = vst [vmem:[%s6 + $0x48] sm:$0xff] %v489
  %506 = vst [vmem:[%s6 + $0x50] sm:$0xff] %v490
  %507 = vst.msk [vmem:[%s6 + $0x58] sm:$0xff] %vm33, %v491
  %508 = vst [vmem:[%s6 + $0x60] sm:$0xff] %v492
  %509 = vst [vmem:[%s6 + $0x68] sm:$0xff] %v493
  %510 = vst [vmem:[%s6 + $0x70] sm:$0xff] %v494
  %511 = vst.msk [vmem:[%s6 + $0x78] sm:$0xff] %vm33, %v495
  // Predicated region
  $region26: #{model_forward.1} parent=0 // pred_check
    _
  $region27: #{model_forward.1} parent=0 // pred_check_branch
    %513 = sbr.rel (0) target = $region29
  $region28: #{model_forward.1} parent=0 // pred_region
    _
  $region29: #{model_forward.1} parent=0 // pred_fallthru
    _
  // Predicated region
  $region30: #{model_forward.1} parent=0 // pred_check
    _
  $region31: #{model_forward.1} parent=0 // pred_check_branch
    %515 = sbr.rel (0) target = $region33
  $region32: #{model_forward.1} parent=0 // pred_region
    _
  $region33: #{model_forward.1} parent=0 // pred_fallthru
    _

</llo_original>
